<compile_context>
chip_gen: v7x
topology: tpu7x:2x2x1
jax: 0.10.0
libtpu: 0.0.40
codegen_flags: <defaults>
</compile_context>

<pallas_src>
import jax
import jax.numpy as jnp
from jax.experimental import pallas as pl
from jax.experimental.pallas import tpu as pltpu


def _make_channel_kernel(n_t, true_l, use_mxu):
    """Build the kernel with the true (un-padded) symbol count baked in."""
    inv_count = 1.0 / float(n_t * true_l)

    def channel_kernel(x_ref, m_ref, wre_ref, wim_ref, o_ref):
        # x_ref / o_ref : (Bt, 2*N_t, Lp)  rows [0:N_t]=real, [N_t:2*N_t]=imag
        # m_ref         : (Bt, 2*N_t, 2*N_t) real-block form of std * inv(S) @ Uh
        # wre_ref/wim_ref: (Bt, N_t, Lp)   standard-normal noise planes
        x = x_ref[...].astype(jnp.float32)
        m = m_ref[...].astype(jnp.float32)
        w_re = wre_ref[...].astype(jnp.float32)
        w_im = wim_ref[...].astype(jnp.float32)

        # --- power_normalize: z / sqrt(mean(|z|^2)) per batch element.
        # Padded lanes are zero, so summing the padded planes and dividing by the
        # true N_t*L count reproduces mean(|z|^2) exactly.
        sq = x * x
        sum_l = jnp.sum(sq, axis=2, keepdims=True)            # lane reduce (XLU)
        tot = jnp.sum(sum_l, axis=1, keepdims=True)           # (Bt, 1, 1)
        xn = x * jax.lax.rsqrt(tot * inv_count)               # rsqrt -> EUP slot

        # --- V = (std * [[M_re, -M_im], [M_im, M_re]]) @ [W_re; W_im]
        if use_mxu:
            # K >= 16: run the mixing on the MXU (vector-extended slot), leaving
            # the VPU free for the normalize/add.
            v = (jnp.einsum('bij,bjl->bil', m[:, :, :n_t], w_re,
                            preferred_element_type=jnp.float32)
                 + jnp.einsum('bij,bjl->bil', m[:, :, n_t:], w_im,
                              preferred_element_type=jnp.float32))
        else:
            # K = 2*N_t <= 8: unrolled VPU broadcast-FMAs beat an <8-row MXU dot.
            v = m[:, :, 0:1] * w_re[:, 0:1, :]
            for j in range(1, n_t):
                v = v + m[:, :, j:j + 1] * w_re[:, j:j + 1, :]
            for j in range(n_t):
                v = v + m[:, :, n_t + j:n_t + j + 1] * w_im[:, j:j + 1, :]

        # --- Y = normalized_X + inv(S) @ Uh @ (std * W), one lane-dense slab
        o_ref[...] = (xn + v).astype(o_ref.dtype)

    return channel_kernel


def _complex_inverse_real_blocks(a_re, a_im):
    """inv(A_re + i*A_im) via a real 2Nx2N block inverse (host-side JAX, TPU-safe)."""
    n = a_re.shape[-1]
    top = jnp.concatenate([a_re, -a_im], axis=-1)
    bot = jnp.concatenate([a_im, a_re], axis=-1)
    big = jnp.concatenate([top, bot], axis=-2)                 # (B, 2n, 2n)
    big_inv = jnp.linalg.inv(big)
    return big_inv[..., :n, :n], big_inv[..., n:, :n]


def _vmem_budget_bytes():
    """Per-generation scoped-VMEM budget (v5e/v6e ~64 MiB, v7x ~48 MiB)."""
    try:
        phys = int(pltpu.get_tpu_info().vmem_capacity_bytes)
    except Exception:
        phys = 128 << 20
    return int(min((phys * 3) // 4, 64 << 20))


def _choose_bt(batch, per_elem_bytes, vmem_budget):
    """Largest Bt dividing B whose double-buffered footprint fits the budget."""
    chosen = 1
    for bt in range(batch, 0, -1):
        if batch % bt != 0:
            continue
        if 2 * bt * per_elem_bytes <= int(vmem_budget * 0.8):
            chosen = bt
            break
    # v7x: keep both TensorCores busy when half-batch blocks are still in the
    # >=512 KiB roofline tile regime; at tiny batches grid=(1,) is intentional.
    if chosen == batch and batch % 2 == 0 and (batch // 2) * per_elem_bytes >= (512 << 10):
        chosen = batch // 2
    return chosen


def channel_forward(inputs, Uh, S_diag, snr, w_re_std, w_im_std, N_t):
    in_shape = inputs.shape
    B = in_shape[0]
    z = inputs.reshape(B, -1).astype(jnp.float32)
    F = z.shape[1]
    half = F // 2
    L = half // N_t
    two_nt = 2 * N_t

    # torch.complex(split[0], split[1]) maps exactly onto rows [0:N_t] / [N_t:2*N_t]
    # of this stacked view, so the input split and the final cat(real, imag) are
    # zero-cost reshapes. Noise planes are passed separately (no HBM concat).
    x = z.reshape(B, two_nt, L)
    w_re = w_re_std.reshape(B, N_t, L)
    w_im = w_im_std.reshape(B, N_t, L)
    # TODO(synk): the AWGN could be generated on-chip with pltpu.prng_seed /
    # stateful_normal (removes one of the three plane streams), but that changes
    # the RNG stream vs the torch.randn reference, so pre-generated noise is kept.

    # Lane-dense stores: pad L up to a 128 multiple if a future config needs it.
    Lp = ((L + 127) // 128) * 128
    if Lp != L:
        pad = [(0, 0), (0, 0), (0, Lp - L)]
        x = jnp.pad(x, pad)
        w_re = jnp.pad(w_re, pad)
        w_im = jnp.pad(w_im, pad)

    # TODO(synk): torch.inverse (general complex NxN inverse) has no clean Pallas
    # equivalent; the tiny (N_t x N_t) inverse and the Sinv @ Uh fusion stay in
    # plain JAX and only the fused real mixing matrix is fed to the kernel.
    hi = jax.lax.Precision.HIGHEST
    s_re = jnp.real(S_diag).astype(jnp.float32)
    s_im = jnp.imag(S_diag).astype(jnp.float32)
    si_re, si_im = _complex_inverse_real_blocks(s_re, s_im)
    uh_re = jnp.real(Uh).astype(jnp.float32)
    uh_im = jnp.imag(Uh).astype(jnp.float32)
    m_re = (jnp.einsum('bij,bjk->bik', si_re, uh_re, precision=hi)
            - jnp.einsum('bij,bjk->bik', si_im, uh_im, precision=hi))
    m_im = (jnp.einsum('bij,bjk->bik', si_re, uh_im, precision=hi)
            + jnp.einsum('bij,bjk->bik', si_im, uh_re, precision=hi))

    # Fold the per-batch AWGN std = sqrt(10^(-snr/10) / 2) into the mixing matrix
    # (2*N_t^2 host-side multiplies instead of scaling the full noise planes).
    std = jnp.sqrt(jnp.power(10.0, -snr.reshape(B).astype(jnp.float32) / 10.0) * 0.5)
    m_blk = jnp.concatenate(
        [jnp.concatenate([m_re, -m_im], axis=-1),
         jnp.concatenate([m_im, m_re], axis=-1)], axis=-2) * std[:, None, None]
    # TODO(synk): for very large B, flatten m_blk to (B, two_nt*two_nt) to avoid
    # narrow strided DMAs of the 8-lane mixing tile (negligible at small B).

    # Generation-aware tile chooser: double-buffered working set per grid step is
    # 2 * (x + w_re + w_im + out + m) blocks.
    itemsize = 4
    per_elem_bytes = (3 * two_nt * Lp + two_nt * two_nt) * itemsize
    vmem_budget = _vmem_budget_bytes()
    Bt = _choose_bt(B, per_elem_bytes, vmem_budget)
    grid = (B // Bt,)

    spec_x = pl.BlockSpec((Bt, two_nt, Lp), lambda i: (i, 0, 0))
    spec_w = pl.BlockSpec((Bt, N_t, Lp), lambda i: (i, 0, 0))
    spec_mix = pl.BlockSpec((Bt, two_nt, two_nt), lambda i: (i, 0, 0))

    kernel = _make_channel_kernel(N_t, L, use_mxu=(two_nt > 8))

    out = pl.pallas_call(
        kernel,
        grid=grid,
        in_specs=[spec_x, spec_mix, spec_w, spec_w],
        out_specs=spec_x,
        out_shape=jax.ShapeDtypeStruct((B, two_nt, Lp), jnp.float32),
        compiler_params=pltpu.CompilerParams(
            # Batch axis is independent: multi-step grids shard across v7x's two
            # TensorCores; with grid=(1,) (tiny demo batch) this is a no-op.
            dimension_semantics=("parallel",),
            vmem_limit_bytes=vmem_budget),
    )(x, m_blk, w_re, w_im)

    if Lp != L:
        out = out[:, :, :L]
    # Rows are [real(N_t); imag(N_t)], so this reshape IS torch.cat((re, im), dim=1).
    return out.reshape(in_shape)


def _reference(inputs, Uh, S_diag, snr, w_re_std, w_im_std, N_t):
    """Plain-JAX reference mirroring the original torch forward (for sanity check)."""
    hi = jax.lax.Precision.HIGHEST
    B = inputs.shape[0]
    z = inputs.reshape(B, -1).astype(jnp.float32)
    half = z.shape[1] // 2
    L = half // N_t
    x_re = z[:, :half].reshape(B, N_t, L)
    x_im = z[:, half:].reshape(B, N_t, L)
    ave = jnp.mean(x_re * x_re + x_im * x_im, axis=(1, 2), keepdims=True)
    xn_re = x_re / jnp.sqrt(ave)
    xn_im = x_im / jnp.sqrt(ave)
    std = jnp.sqrt(10.0 ** (-snr.reshape(B, 1, 1).astype(jnp.float32) / 10.0) * 0.5)
    w_re = w_re_std.astype(jnp.float32) * std
    w_im = w_im_std.astype(jnp.float32) * std
    s_re = jnp.real(S_diag).astype(jnp.float32)
    s_im = jnp.imag(S_diag).astype(jnp.float32)
    si_re, si_im = _complex_inverse_real_blocks(s_re, s_im)
    uh_re = jnp.real(Uh).astype(jnp.float32)
    uh_im = jnp.imag(Uh).astype(jnp.float32)
    mm = lambda a, b: jnp.einsum('bij,bjl->bil', a, b, precision=hi)
    t_re = mm(uh_re, w_re) - mm(uh_im, w_im)
    t_im = mm(uh_re, w_im) + mm(uh_im, w_re)
    v_re = mm(si_re, t_re) - mm(si_im, t_im)
    v_im = mm(si_re, t_im) + mm(si_im, t_re)
    y_re = xn_re + v_re
    y_im = xn_im + v_im
    y = jnp.concatenate([y_re.reshape(B, -1), y_im.reshape(B, -1)], axis=1)
    return y.reshape(inputs.shape)


if __name__ == "__main__":
    key = jax.random.PRNGKey(0)
    B, C, H, W = 2, 4, 16, 16          # inputs (NCHW)
    N_t = 4                            # MIMO_num
    half = (C * H * W) // 2            # 512 complex symbols per batch element
    L = half // N_t                    # 128 symbols per antenna

    k1, k2, k3, k4, k5, k6 = jax.random.split(key, 6)
    inputs = jax.random.normal(k1, (B, C, H, W), dtype=jnp.float32)

    # Uh: random complex (B, N_t, N_t); S_diag: well-conditioned complex diagonal
    uh_r = jax.random.normal(k2, (B, N_t, N_t), dtype=jnp.float32)
    uh_i = jax.random.normal(k3, (B, N_t, N_t), dtype=jnp.float32)
    Uh = (uh_r + 1j * uh_i).astype(jnp.complex64)
    sdiag_vals = 0.5 + jax.random.uniform(k4, (B, N_t), dtype=jnp.float32)
    S_diag = jax.vmap(jnp.diag)(sdiag_vals).astype(jnp.complex64)

    snr = jnp.array([[10.0], [5.0]], dtype=jnp.float32)   # per-batch SNR in dB

    # standard-normal noise (SNR-derived std is folded into the mixing matrix)
    w_re_std = jax.random.normal(k5, (B, N_t, L), dtype=jnp.float32)
    w_im_std = jax.random.normal(k6, (B, N_t, L), dtype=jnp.float32)

    out = channel_forward(inputs, Uh, S_diag, snr, w_re_std, w_im_std, N_t)
    out = jax.block_until_ready(out)

    assert out.shape == inputs.shape and out.dtype == jnp.float32
    assert bool(jnp.all(jnp.isfinite(out)))

    ref = _reference(inputs, Uh, S_diag, snr, w_re_std, w_im_std, N_t)
    max_err = float(jnp.max(jnp.abs(out - ref)))
    assert max_err < 1e-2, f"mismatch vs reference: {max_err}"
    print("KERNEL_OK")
</pallas_src>

<mosaic_0001>
module attributes {stable_mosaic.version = 11 : i64} {
  func.func @channel_kernel(%arg0: i32, %arg1: memref<2x8x128xf32, #tpu.memory_space<vmem>>, %arg2: memref<2x8x8xf32, #tpu.memory_space<vmem>>, %arg3: memref<2x4x128xf32, #tpu.memory_space<vmem>>, %arg4: memref<2x4x128xf32, #tpu.memory_space<vmem>>, %arg5: memref<2x8x128xf32, #tpu.memory_space<vmem>>) attributes {dimension_semantics = [#tpu.dimension_semantics<parallel>], iteration_bounds = array<i64: 1>, scalar_prefetch = 0 : i64, scratch_operands = 0 : i64, tpu.core_type = #tpu.core_type<tc>, window_params = [{transform_indices = @transform_0, window_bounds = array<i64: 2, 8, 128>}, {transform_indices = @transform_1, window_bounds = array<i64: 2, 8, 8>}, {transform_indices = @transform_2, window_bounds = array<i64: 2, 4, 128>}, {transform_indices = @transform_3, window_bounds = array<i64: 2, 4, 128>}, {transform_indices = @transform_4, window_bounds = array<i64: 2, 8, 128>}]} {
    %c0 = arith.constant 0 : index
    %c0_0 = arith.constant 0 : index
    %c0_1 = arith.constant 0 : index
    %0 = vector.load %arg1[%c0, %c0_0, %c0_1] : memref<2x8x128xf32, #tpu.memory_space<vmem>>, vector<2x8x128xf32>
    %c0_2 = arith.constant 0 : index
    %c0_3 = arith.constant 0 : index
    %c0_4 = arith.constant 0 : index
    %1 = vector.load %arg2[%c0_2, %c0_3, %c0_4] : memref<2x8x8xf32, #tpu.memory_space<vmem>>, vector<2x8x8xf32>
    %c0_5 = arith.constant 0 : index
    %c0_6 = arith.constant 0 : index
    %c0_7 = arith.constant 0 : index
    %2 = vector.load %arg3[%c0_5, %c0_6, %c0_7] : memref<2x4x128xf32, #tpu.memory_space<vmem>>, vector<2x4x128xf32>
    %c0_8 = arith.constant 0 : index
    %c0_9 = arith.constant 0 : index
    %c0_10 = arith.constant 0 : index
    %3 = vector.load %arg4[%c0_8, %c0_9, %c0_10] : memref<2x4x128xf32, #tpu.memory_space<vmem>>, vector<2x4x128xf32>
    %4 = arith.mulf %0, %0 : vector<2x8x128xf32>
    %cst = arith.constant dense<0.000000e+00> : vector<2x8xf32>
    %5 = vector.multi_reduction <add>, %4, %cst [2] : vector<2x8x128xf32> to vector<2x8xf32>
    %6 = vector.shape_cast %5 : vector<2x8xf32> to vector<2x8x1xf32>
    %cst_11 = arith.constant dense<0.000000e+00> : vector<2x1xf32>
    %7 = vector.multi_reduction <add>, %6, %cst_11 [1] : vector<2x8x1xf32> to vector<2x1xf32>
    %8 = vector.shape_cast %7 : vector<2x1xf32> to vector<2x1x1xf32>
    %cst_12 = arith.constant 0.001953125 : f32
    %9 = vector.broadcast %cst_12 : f32 to vector<2x1x1xf32>
    %10 = arith.mulf %8, %9 : vector<2x1x1xf32>
    %11 = math.rsqrt %10 : vector<2x1x1xf32>
    %12 = vector.broadcast %11 : vector<2x1x1xf32> to vector<2x8x128xf32>
    %13 = arith.mulf %0, %12 : vector<2x8x128xf32>
    %14 = vector.extract_strided_slice %1 {offsets = [0, 0, 0], sizes = [2, 8, 1], strides = [1, 1, 1]} : vector<2x8x8xf32> to vector<2x8x1xf32>
    %15 = vector.extract_strided_slice %2 {offsets = [0, 0, 0], sizes = [2, 1, 128], strides = [1, 1, 1]} : vector<2x4x128xf32> to vector<2x1x128xf32>
    %16 = vector.broadcast %14 : vector<2x8x1xf32> to vector<2x8x128xf32>
    %17 = vector.broadcast %15 : vector<2x1x128xf32> to vector<2x8x128xf32>
    %18 = arith.mulf %16, %17 : vector<2x8x128xf32>
    %19 = vector.extract_strided_slice %1 {offsets = [0, 0, 1], sizes = [2, 8, 1], strides = [1, 1, 1]} : vector<2x8x8xf32> to vector<2x8x1xf32>
    %20 = vector.extract_strided_slice %2 {offsets = [0, 1, 0], sizes = [2, 1, 128], strides = [1, 1, 1]} : vector<2x4x128xf32> to vector<2x1x128xf32>
    %21 = vector.broadcast %19 : vector<2x8x1xf32> to vector<2x8x128xf32>
    %22 = vector.broadcast %20 : vector<2x1x128xf32> to vector<2x8x128xf32>
    %23 = arith.mulf %21, %22 : vector<2x8x128xf32>
    %24 = arith.addf %18, %23 : vector<2x8x128xf32>
    %25 = vector.extract_strided_slice %1 {offsets = [0, 0, 2], sizes = [2, 8, 1], strides = [1, 1, 1]} : vector<2x8x8xf32> to vector<2x8x1xf32>
    %26 = vector.extract_strided_slice %2 {offsets = [0, 2, 0], sizes = [2, 1, 128], strides = [1, 1, 1]} : vector<2x4x128xf32> to vector<2x1x128xf32>
    %27 = vector.broadcast %25 : vector<2x8x1xf32> to vector<2x8x128xf32>
    %28 = vector.broadcast %26 : vector<2x1x128xf32> to vector<2x8x128xf32>
    %29 = arith.mulf %27, %28 : vector<2x8x128xf32>
    %30 = arith.addf %24, %29 : vector<2x8x128xf32>
    %31 = vector.extract_strided_slice %1 {offsets = [0, 0, 3], sizes = [2, 8, 1], strides = [1, 1, 1]} : vector<2x8x8xf32> to vector<2x8x1xf32>
    %32 = vector.extract_strided_slice %2 {offsets = [0, 3, 0], sizes = [2, 1, 128], strides = [1, 1, 1]} : vector<2x4x128xf32> to vector<2x1x128xf32>
    %33 = vector.broadcast %31 : vector<2x8x1xf32> to vector<2x8x128xf32>
    %34 = vector.broadcast %32 : vector<2x1x128xf32> to vector<2x8x128xf32>
    %35 = arith.mulf %33, %34 : vector<2x8x128xf32>
    %36 = arith.addf %30, %35 : vector<2x8x128xf32>
    %37 = vector.extract_strided_slice %1 {offsets = [0, 0, 4], sizes = [2, 8, 1], strides = [1, 1, 1]} : vector<2x8x8xf32> to vector<2x8x1xf32>
    %38 = vector.extract_strided_slice %3 {offsets = [0, 0, 0], sizes = [2, 1, 128], strides = [1, 1, 1]} : vector<2x4x128xf32> to vector<2x1x128xf32>
    %39 = vector.broadcast %37 : vector<2x8x1xf32> to vector<2x8x128xf32>
    %40 = vector.broadcast %38 : vector<2x1x128xf32> to vector<2x8x128xf32>
    %41 = arith.mulf %39, %40 : vector<2x8x128xf32>
    %42 = arith.addf %36, %41 : vector<2x8x128xf32>
    %43 = vector.extract_strided_slice %1 {offsets = [0, 0, 5], sizes = [2, 8, 1], strides = [1, 1, 1]} : vector<2x8x8xf32> to vector<2x8x1xf32>
    %44 = vector.extract_strided_slice %3 {offsets = [0, 1, 0], sizes = [2, 1, 128], strides = [1, 1, 1]} : vector<2x4x128xf32> to vector<2x1x128xf32>
    %45 = vector.broadcast %43 : vector<2x8x1xf32> to vector<2x8x128xf32>
    %46 = vector.broadcast %44 : vector<2x1x128xf32> to vector<2x8x128xf32>
    %47 = arith.mulf %45, %46 : vector<2x8x128xf32>
    %48 = arith.addf %42, %47 : vector<2x8x128xf32>
    %49 = vector.extract_strided_slice %1 {offsets = [0, 0, 6], sizes = [2, 8, 1], strides = [1, 1, 1]} : vector<2x8x8xf32> to vector<2x8x1xf32>
    %50 = vector.extract_strided_slice %3 {offsets = [0, 2, 0], sizes = [2, 1, 128], strides = [1, 1, 1]} : vector<2x4x128xf32> to vector<2x1x128xf32>
    %51 = vector.broadcast %49 : vector<2x8x1xf32> to vector<2x8x128xf32>
    %52 = vector.broadcast %50 : vector<2x1x128xf32> to vector<2x8x128xf32>
    %53 = arith.mulf %51, %52 : vector<2x8x128xf32>
    %54 = arith.addf %48, %53 : vector<2x8x128xf32>
    %55 = vector.extract_strided_slice %1 {offsets = [0, 0, 7], sizes = [2, 8, 1], strides = [1, 1, 1]} : vector<2x8x8xf32> to vector<2x8x1xf32>
    %56 = vector.extract_strided_slice %3 {offsets = [0, 3, 0], sizes = [2, 1, 128], strides = [1, 1, 1]} : vector<2x4x128xf32> to vector<2x1x128xf32>
    %57 = vector.broadcast %55 : vector<2x8x1xf32> to vector<2x8x128xf32>
    %58 = vector.broadcast %56 : vector<2x1x128xf32> to vector<2x8x128xf32>
    %59 = arith.mulf %57, %58 : vector<2x8x128xf32>
    %60 = arith.addf %54, %59 : vector<2x8x128xf32>
    %61 = arith.addf %13, %60 : vector<2x8x128xf32>
    %c0_13 = arith.constant 0 : index
    %c0_14 = arith.constant 0 : index
    %c0_15 = arith.constant 0 : index
    %62 = vector.load %arg5[%c0_13, %c0_14, %c0_15] : memref<2x8x128xf32, #tpu.memory_space<vmem>>, vector<2x8x128xf32>
    tpu.vector_store %arg5[%c0_13, %c0_14, %c0_15], %61 {strides = array<i32>} : memref<2x8x128xf32, #tpu.memory_space<vmem>>, vector<2x8x128xf32>,
    return
  }
  func.func @transform_0(%arg0: i32) -> (i32, i32, i32) {
    %c0_i32 = arith.constant 0 : i32
    %c0_i32_0 = arith.constant 0 : i32
    %c0_i32_1 = arith.constant 0 : i32
    return %arg0, %c0_i32, %c0_i32_0 : i32, i32, i32
  }
  func.func @transform_1(%arg0: i32) -> (i32, i32, i32) {
    %c0_i32 = arith.constant 0 : i32
    %c0_i32_0 = arith.constant 0 : i32
    %c0_i32_1 = arith.constant 0 : i32
    return %arg0, %c0_i32, %c0_i32_0 : i32, i32, i32
  }
  func.func @transform_2(%arg0: i32) -> (i32, i32, i32) {
    %c0_i32 = arith.constant 0 : i32
    %c0_i32_0 = arith.constant 0 : i32
    %c0_i32_1 = arith.constant 0 : i32
    return %arg0, %c0_i32, %c0_i32_0 : i32, i32, i32
  }
  func.func @transform_3(%arg0: i32) -> (i32, i32, i32) {
    %c0_i32 = arith.constant 0 : i32
    %c0_i32_0 = arith.constant 0 : i32
    %c0_i32_1 = arith.constant 0 : i32
    return %arg0, %c0_i32, %c0_i32_0 : i32, i32, i32
  }
  func.func @transform_4(%arg0: i32) -> (i32, i32, i32) {
    %c0_i32 = arith.constant 0 : i32
    %c0_i32_0 = arith.constant 0 : i32
    %c0_i32_1 = arith.constant 0 : i32
    return %arg0, %c0_i32, %c0_i32_0 : i32, i32, i32
  }
}

</mosaic_0001>

<llo_original>
// kernel: tpu_custom_call.1
$region0: #{tpu_custom_call.1}
  #allocation0 [shape = 'u32[]', space=smem, size = 0x4, offset = 0x4, fixed_abs, tag = 'smem constant byte address 0x4 - core index']
  #allocation1 [shape = 'u32[144,128]{1,0:T(1,128)}', space=vmem, size = 0x12000, scoped, tag = 'internal scratch']
  %s0 = inlined_call_operand.hbm [shape: f32[2,8,128], index: 0, kind: input, shape index: {}]
  %s1 = inlined_call_operand.hbm [shape: f32[2,8,8], index: 1, kind: input, shape index: {}]
  %s2 = inlined_call_operand.hbm [shape: f32[2,4,128], index: 2, kind: input, shape index: {}]
  %s3 = inlined_call_operand.hbm [shape: f32[2,4,128], index: 3, kind: input, shape index: {}]
  %s4 = inlined_call_operand.hbm [shape: f32[2,8,128], index: 4, kind: output, shape index: {}]
  %s5 = sld [smem:[#allocation0]]
  $region42: #{tpu_custom_call.1} parent=0
    _
  %s7 = ssub.s32 1, %s5
  %s8 = scalar_select 0, %s7, %s5
  $region1: #{tpu_custom_call.1} parent=0
    #allocation2 [shape = 'u8[8192]{0}', space=vmem, size = 0x2000, scoped, tag = 'input window, operand 0, single buffered']
    #allocation3 [shape = 's32[1]{0}', space=sflag, size = 0x4, scoped, tag = 'scoped memory for tpu_custom_call.1']
    #allocation4 [shape = 's32[1]{0}', space=sflag, size = 0x4, scoped, tag = 'scoped memory for tpu_custom_call.1']
    #allocation5 [shape = 'u8[8192]{0}', space=vmem, size = 0x2000, scoped, tag = 'input window, operand 1, single buffered']
    #allocation6 [shape = 's32[1]{0}', space=sflag, size = 0x4, scoped, tag = 'scoped memory for tpu_custom_call.1']
    #allocation7 [shape = 'u8[4096]{0}', space=vmem, size = 0x1000, scoped, tag = 'input window, operand 2, single buffered']
    #allocation8 [shape = 'u8[4096]{0}', space=vmem, size = 0x1000, scoped, tag = 'input window, operand 3, single buffered']
    #allocation9 [shape = 's32[1]{0}', space=sflag, size = 0x4, scoped, tag = 'scoped memory for tpu_custom_call.1']
    #allocation10 [shape = 'u8[8192]{0}', space=vmem, size = 0x2000, scoped, tag = 'output window, operand 0, single buffered']
    %9 = vsyncpa [#allocation3], 0
    %10 = vsyncpa [#allocation6], 0
    %11 = vsyncpa [#allocation9], 0
    %12 = vsyncpa [#allocation4], 0
    // Predicated region
    $region2: #{tpu_custom_call.1} parent=1 // pred_check
      _
    $region3: #{tpu_custom_call.1} parent=1 // pred_check_branch
      %14 = sbr.rel (0) target = $region5
    $region4: #{tpu_custom_call.1} parent=1 // pred_region
      %s16 = ssub.s32 256, 256
      %17 = vsyncadd [#allocation3], %s16
      %s18 = sshll.u32 [#allocation2], 4
      %s19 = int_to_ptr.vmem [resolvable:$true] %s18
      %24 = dma.hbm_to_vmem [thread:$0]  %s0, 256, %s19, [#allocation3], 128, 128, 8
    $region5: #{tpu_custom_call.1} parent=1 // pred_fallthru
      _
    // Predicated region
    $region6: #{tpu_custom_call.1} parent=1 // pred_check
      _
    $region7: #{tpu_custom_call.1} parent=1 // pred_check_branch
      %26 = sbr.rel (0) target = $region9
    $region8: #{tpu_custom_call.1} parent=1 // pred_region
      %s28 = ssub.s32 256, 256
      %29 = vsyncadd [#allocation6], %s28
      %s30 = sshll.u32 [#allocation5], 4
      %s31 = int_to_ptr.vmem [resolvable:$true] %s30
      %36 = dma.hbm_to_vmem [thread:$0]  %s1, 256, %s31, [#allocation6], 128, 128, 8
    $region9: #{tpu_custom_call.1} parent=1 // pred_fallthru
      _
    // Predicated region
    $region10: #{tpu_custom_call.1} parent=1 // pred_check
      _
    $region11: #{tpu_custom_call.1} parent=1 // pred_check_branch
      %38 = sbr.rel (0) target = $region13
    $region12: #{tpu_custom_call.1} parent=1 // pred_region
      %s40 = ssub.s32 128, 128
      %41 = vsyncadd [#allocation6], %s40
      %s42 = sshll.u32 [#allocation7], 4
      %s43 = int_to_ptr.vmem [resolvable:$true] %s42
      %48 = dma.hbm_to_vmem [thread:$0]  %s2, 128, %s43, [#allocation6], 64, 64, 4
    $region13: #{tpu_custom_call.1} parent=1 // pred_fallthru
      _
    // Predicated region
    $region14: #{tpu_custom_call.1} parent=1 // pred_check
      _
    $region15: #{tpu_custom_call.1} parent=1 // pred_check_branch
      %50 = sbr.rel (0) target = $region17
    $region16: #{tpu_custom_call.1} parent=1 // pred_region
      %s52 = ssub.s32 128, 128
      %53 = vsyncadd [#allocation9], %s52
      %s54 = sshll.u32 [#allocation8], 4
      %s55 = int_to_ptr.vmem [resolvable:$true] %s54
      %60 = dma.hbm_to_vmem [thread:$0]  %s3, 128, %s55, [#allocation9], 64, 64, 4
    $region17: #{tpu_custom_call.1} parent=1 // pred_fallthru
      _
    // Predicated region
    $region18: #{tpu_custom_call.1} parent=1 // pred_check
      _
    $region19: #{tpu_custom_call.1} parent=1 // pred_check_branch
      %62 = sbr.rel (0) target = $region21
    $region20: #{tpu_custom_call.1} parent=1 // pred_region
      %63 = dma.done [#allocation3], 256
    $region21: #{tpu_custom_call.1} parent=1 // pred_fallthru
      _
    // Predicated region
    $region22: #{tpu_custom_call.1} parent=1 // pred_check
      _
    $region23: #{tpu_custom_call.1} parent=1 // pred_check_branch
      %65 = sbr.rel (0) target = $region25
    $region24: #{tpu_custom_call.1} parent=1 // pred_region
      %66 = dma.done [#allocation6], 256
    $region25: #{tpu_custom_call.1} parent=1 // pred_fallthru
      _
    // Predicated region
    $region26: #{tpu_custom_call.1} parent=1 // pred_check
      _
    $region27: #{tpu_custom_call.1} parent=1 // pred_check_branch
      %68 = sbr.rel (0) target = $region29
    $region28: #{tpu_custom_call.1} parent=1 // pred_region
      %69 = dma.done [#allocation6], 128
    $region29: #{tpu_custom_call.1} parent=1 // pred_fallthru
      _
    // Predicated region
    $region30: #{tpu_custom_call.1} parent=1 // pred_check
      _
    $region31: #{tpu_custom_call.1} parent=1 // pred_check_branch
      %71 = sbr.rel (0) target = $region33
    $region32: #{tpu_custom_call.1} parent=1 // pred_region
      %72 = dma.done [#allocation9], 128
    $region33: #{tpu_custom_call.1} parent=1 // pred_fallthru
      _
    %v73 = vld [vmem:[#allocation2] sm:$0xff]
    %v74 = vld [vmem:[#allocation2 + $0x8] sm:$0xff]
    %v75 = vld [vmem:[#allocation5] sm:$0xff]
    %v76 = vld [vmem:[#allocation5 + $0x8] sm:$0xff]
    %v77 = vld [vmem:[#allocation7] sm:$0xf]
    %v78 = vld [vmem:[#allocation7 + $0x4] sm:$0xf]
    %v79 = vld [vmem:[#allocation8] sm:$0xf]
    %v80 = vld [vmem:[#allocation8 + $0x4] sm:$0xf]
    %v81 = vmul.f32 %v73, %v73
    %v82 = vmul.f32 %v74, %v74
    %83 = vadd.xlane.f32.xlu0 %v81
    %v84 = vpop.xlane.xlu0 %83
    %85 = vadd.xlane.f32.xlu0 %v82
    %v86 = vpop.xlane.xlu0 %85
    %v87 = vrot.slane %v84, 4
    %v88 = vadd.f32 %v84, %v87
    %v89 = vrot.slane %v88, 2
    %v90 = vadd.f32 %v88, %v89
    %v91 = vrot.slane %v90, 1
    %v92 = vadd.f32 %v90, %v91
    %v93 = vrot.slane %v86, 4
    %v94 = vadd.f32 %v86, %v93
    %v95 = vrot.slane %v94, 2
    %v96 = vadd.f32 %v94, %v95
    %v97 = vrot.slane %v96, 1
    %v98 = vadd.f32 %v96, %v97
    %v99 = vmul.f32 %v92, 0.001953125
    %v100 = vmul.f32 %v98, 0.001953125
    %v101 = vrsqrt.pop %v99
    %v102 = vrsqrt.pop %v100
    %v103 = vmul.f32 %v73, %v101
    %v104 = vmul.f32 %v74, %v102
    %106 = vset.pattern.permute.xlu0 0
    %107 = vperm.xlu0 %106, %v75
    %v108 = vpop.permute.xlu0 %107
    %111 = vset.pattern.permute.xlu0 0
    %112 = vperm.xlu0 %111, %v76
    %v113 = vpop.permute.xlu0 %112
    %v115 = vlaneseq
    %v116 = vshrl.u32 %v115, 7
    %v117 = vsub.s32 0, %v116
    %v118 = vrot.slane %v77, %v117
    %v119 = vlaneseq
    %v120 = vshrl.u32 %v119, 7
    %v121 = vsub.s32 0, %v120
    %v122 = vrot.slane %v78, %v121
    %v123 = vmul.f32 %v108, %v118
    %v124 = vmul.f32 %v113, %v122
    %125 = vset.pattern.permute.xlu0 1
    %126 = vperm.xlu0 %125, %v75
    %v127 = vpop.permute.xlu0 %126
    %129 = vset.pattern.permute.xlu0 1
    %130 = vperm.xlu0 %129, %v76
    %v131 = vpop.permute.xlu0 %130
    %v133 = vlaneseq
    %v134 = vshrl.u32 %v133, 7
    %v135 = vsub.s32 1, %v134
    %v136 = vrot.slane %v77, %v135
    %v137 = vlaneseq
    %v138 = vshrl.u32 %v137, 7
    %v139 = vsub.s32 1, %v138
    %v140 = vrot.slane %v78, %v139
    %v141 = vmul.f32 %v127, %v136
    %v142 = vmul.f32 %v131, %v140
    %v143 = vadd.f32 %v123, %v141
    %v144 = vadd.f32 %v124, %v142
    %145 = vset.pattern.permute.xlu0 2
    %146 = vperm.xlu0 %145, %v75
    %v147 = vpop.permute.xlu0 %146
    %149 = vset.pattern.permute.xlu0 2
    %150 = vperm.xlu0 %149, %v76
    %v151 = vpop.permute.xlu0 %150
    %v153 = vlaneseq
    %v154 = vshrl.u32 %v153, 7
    %v155 = vsub.s32 2, %v154
    %v156 = vrot.slane %v77, %v155
    %v157 = vlaneseq
    %v158 = vshrl.u32 %v157, 7
    %v159 = vsub.s32 2, %v158
    %v160 = vrot.slane %v78, %v159
    %v161 = vmul.f32 %v147, %v156
    %v162 = vmul.f32 %v151, %v160
    %v163 = vadd.f32 %v143, %v161
    %v164 = vadd.f32 %v144, %v162
    %165 = vset.pattern.permute.xlu0 3
    %166 = vperm.xlu0 %165, %v75
    %v167 = vpop.permute.xlu0 %166
    %169 = vset.pattern.permute.xlu0 3
    %170 = vperm.xlu0 %169, %v76
    %v171 = vpop.permute.xlu0 %170
    %v173 = vlaneseq
    %v174 = vshrl.u32 %v173, 7
    %v175 = vsub.s32 3, %v174
    %v176 = vrot.slane %v77, %v175
    %v177 = vlaneseq
    %v178 = vshrl.u32 %v177, 7
    %v179 = vsub.s32 3, %v178
    %v180 = vrot.slane %v78, %v179
    %v181 = vmul.f32 %v167, %v176
    %v182 = vmul.f32 %v171, %v180
    %v183 = vadd.f32 %v163, %v181
    %v184 = vadd.f32 %v164, %v182
    %185 = vset.pattern.permute.xlu0 4
    %186 = vperm.xlu0 %185, %v75
    %v187 = vpop.permute.xlu0 %186
    %189 = vset.pattern.permute.xlu0 4
    %190 = vperm.xlu0 %189, %v76
    %v191 = vpop.permute.xlu0 %190
    %v193 = vlaneseq
    %v194 = vshrl.u32 %v193, 7
    %v195 = vsub.s32 0, %v194
    %v196 = vrot.slane %v79, %v195
    %v197 = vlaneseq
    %v198 = vshrl.u32 %v197, 7
    %v199 = vsub.s32 0, %v198
    %v200 = vrot.slane %v80, %v199
    %v201 = vmul.f32 %v187, %v196
    %v202 = vmul.f32 %v191, %v200
    %v203 = vadd.f32 %v183, %v201
    %v204 = vadd.f32 %v184, %v202
    %205 = vset.pattern.permute.xlu0 5
    %206 = vperm.xlu0 %205, %v75
    %v207 = vpop.permute.xlu0 %206
    %209 = vset.pattern.permute.xlu0 5
    %210 = vperm.xlu0 %209, %v76
    %v211 = vpop.permute.xlu0 %210
    %v213 = vlaneseq
    %v214 = vshrl.u32 %v213, 7
    %v215 = vsub.s32 1, %v214
    %v216 = vrot.slane %v79, %v215
    %v217 = vlaneseq
    %v218 = vshrl.u32 %v217, 7
    %v219 = vsub.s32 1, %v218
    %v220 = vrot.slane %v80, %v219
    %v221 = vmul.f32 %v207, %v216
    %v222 = vmul.f32 %v211, %v220
    %v223 = vadd.f32 %v203, %v221
    %v224 = vadd.f32 %v204, %v222
    %225 = vset.pattern.permute.xlu0 6
    %226 = vperm.xlu0 %225, %v75
    %v227 = vpop.permute.xlu0 %226
    %229 = vset.pattern.permute.xlu0 6
    %230 = vperm.xlu0 %229, %v76
    %v231 = vpop.permute.xlu0 %230
    %v233 = vlaneseq
    %v234 = vshrl.u32 %v233, 7
    %v235 = vsub.s32 2, %v234
    %v236 = vrot.slane %v79, %v235
    %v237 = vlaneseq
    %v238 = vshrl.u32 %v237, 7
    %v239 = vsub.s32 2, %v238
    %v240 = vrot.slane %v80, %v239
    %v241 = vmul.f32 %v227, %v236
    %v242 = vmul.f32 %v231, %v240
    %v243 = vadd.f32 %v223, %v241
    %v244 = vadd.f32 %v224, %v242
    %245 = vset.pattern.permute.xlu0 7
    %246 = vperm.xlu0 %245, %v75
    %v247 = vpop.permute.xlu0 %246
    %249 = vset.pattern.permute.xlu0 7
    %250 = vperm.xlu0 %249, %v76
    %v251 = vpop.permute.xlu0 %250
    %v253 = vlaneseq
    %v254 = vshrl.u32 %v253, 7
    %v255 = vsub.s32 3, %v254
    %v256 = vrot.slane %v79, %v255
    %v257 = vlaneseq
    %v258 = vshrl.u32 %v257, 7
    %v259 = vsub.s32 3, %v258
    %v260 = vrot.slane %v80, %v259
    %v261 = vmul.f32 %v247, %v256
    %v262 = vmul.f32 %v251, %v260
    %v263 = vadd.f32 %v243, %v261
    %v264 = vadd.f32 %v244, %v262
    %v265 = vadd.f32 %v103, %v263
    %v266 = vadd.f32 %v104, %v264
    %267 = vst [vmem:[#allocation10] sm:$0xff] %v265
    %268 = vst [vmem:[#allocation10 + $0x8] sm:$0xff] %v266
    // Predicated region
    $region34: #{tpu_custom_call.1} parent=1 // pred_check
      _
    $region35: #{tpu_custom_call.1} parent=1 // pred_check_branch
      %270 = sbr.rel (0) target = $region37
    $region36: #{tpu_custom_call.1} parent=1 // pred_region
      %s272 = ssub.s32 256, 256
      %273 = vsyncadd [#allocation4], %s272
      %s274 = sshll.u32 [#allocation10], 4
      %s275 = int_to_ptr.vmem [resolvable:$true] %s274
      %280 = dma.vmem_to_hbm [thread:$0]  %s275, 256, %s4, [#allocation4], 128, 128, 8
    $region37: #{tpu_custom_call.1} parent=1 // pred_fallthru
      _
    // Predicated region
    $region38: #{tpu_custom_call.1} parent=1 // pred_check
      _
    $region39: #{tpu_custom_call.1} parent=1 // pred_check_branch
      %282 = sbr.rel (0) target = $region41
    $region40: #{tpu_custom_call.1} parent=1 // pred_region
      %283 = dma.done [#allocation4], 256
    $region41: #{tpu_custom_call.1} parent=1 // pred_fallthru
      _
    %284 = vsyncpa [#allocation3], 1
    %285 = vsyncpa [#allocation6], 1
    %286 = vsyncpa [#allocation9], 1
    %287 = vsyncpa [#allocation4], 1

</llo_original>
